<compile_context>
chip_gen: v6e
topology: v6e:2x2x1
jax: 0.10.0
libtpu: 0.0.40
codegen_flags: <defaults>
</compile_context>

<pallas_src>
import jax
import jax.numpy as jnp
from jax.experimental import pallas as pl
from jax.experimental.pallas import tpu as pltpu

IN_F = 28 * 28      # 784
IN_F_PAD = 896      # 7 * 128  (padded contraction dim)
HID = 128
OUT_F = 10
OUT_F_PAD = 128     # lane-dense padded output width


def _mlp_kernel(x_ref, w1_ref, b1_ref, w2_ref, b2_ref, o_ref):
    # x_ref:  [TILE_B, 896] f32     w1_ref: [896, 128] bf16   b1_ref: [1, 128] f32
    # w2_ref: [128, 128]    bf16    b2_ref: [1, 128]   f32    o_ref:  [TILE_B, 128] f32
    x_bf = x_ref[...].astype(jnp.bfloat16)
    h = jnp.dot(x_bf, w1_ref[...], preferred_element_type=jnp.float32)
    h = jnp.maximum(h + b1_ref[...], 0.0)                       # bias + ReLU in f32
    out = jnp.dot(h.astype(jnp.bfloat16), w2_ref[...],
                  preferred_element_type=jnp.float32)
    o_ref[...] = out + b2_ref[...]


def classifier_forward(x_nchw, w1, b1, w2, b2, *, tile_b=None):
    """x_nchw: [B, 1, 28, 28] float32 -> logits [B, 10] float32.

    w1: [784, 128], b1: [128], w2: [128, 10], b2: [10]  (stored (in, out)).
    """
    B = x_nchw.shape[0]
    x_flat = x_nchw.reshape(B, IN_F).astype(jnp.float32)  # nn.Flatten (row-major)

    # Tile selection: 2048 rows f32 double-buffered ~= 14 MiB of x, safe even on
    # v7x's 64 MiB VMEM (32 MiB scoped default).  Small batches use one tiny tile.
    if tile_b is None:
        tile_b = 2048 if B >= 2048 else max(8, ((B + 7) // 8) * 8)
    B_pad = ((B + tile_b - 1) // tile_b) * tile_b

    # Zero-pad batch (to tile multiple) and contraction dim (784 -> 896).
    x_p = jnp.zeros((B_pad, IN_F_PAD), jnp.float32).at[:B, :IN_F].set(x_flat)

    # Weights to bf16 for the MXU; zero-pad W1's K and W2's N dims.
    w1_p = jnp.zeros((IN_F_PAD, HID), jnp.bfloat16).at[:IN_F, :].set(
        w1.astype(jnp.bfloat16))
    w2_p = jnp.zeros((HID, OUT_F_PAD), jnp.bfloat16).at[:, :OUT_F].set(
        w2.astype(jnp.bfloat16))
    b1_p = b1.reshape(1, HID).astype(jnp.float32)
    b2_p = jnp.zeros((1, OUT_F_PAD), jnp.float32).at[:, :OUT_F].set(
        b2.astype(jnp.float32))

    grid = (B_pad // tile_b,)
    flops = 2 * B_pad * (IN_F_PAD * HID + HID * OUT_F_PAD)
    bytes_accessed = (x_p.size * 4 + w1_p.size * 2 + w2_p.size * 2
                      + b1_p.size * 4 + b2_p.size * 4 + B_pad * OUT_F_PAD * 4)

    out = pl.pallas_call(
        _mlp_kernel,
        out_shape=jax.ShapeDtypeStruct((B_pad, OUT_F_PAD), jnp.float32),
        grid_spec=pltpu.PrefetchScalarGridSpec(
            num_scalar_prefetch=0,
            grid=grid,
            in_specs=[
                # x: streamed per batch tile (auto double-buffered).
                pl.BlockSpec((tile_b, IN_F_PAD), lambda i: (i, 0)),
                # Weights / biases: constant index_map -> resident in VMEM.
                pl.BlockSpec((IN_F_PAD, HID), lambda i: (0, 0)),
                pl.BlockSpec((1, HID), lambda i: (0, 0)),
                pl.BlockSpec((HID, OUT_F_PAD), lambda i: (0, 0)),
                pl.BlockSpec((1, OUT_F_PAD), lambda i: (0, 0)),
            ],
            out_specs=pl.BlockSpec((tile_b, OUT_F_PAD), lambda i: (i, 0)),
        ),
        compiler_params=pltpu.CompilerParams(
            dimension_semantics=("parallel",)),
        cost_estimate=pl.CostEstimate(
            flops=flops, transcendentals=0, bytes_accessed=bytes_accessed),
    )(x_p, w1_p, b1_p, w2_p, b2_p)

    # Drop padded rows and the zero-padded logits columns.
    return out[:B, :OUT_F]


def init_params(key):
    """Deterministic parameter init (PyTorch-style uniform fan-in bounds)."""
    k1, k2, k3, k4 = jax.random.split(key, 4)
    bound1 = 1.0 / jnp.sqrt(784.0)
    bound2 = 1.0 / jnp.sqrt(128.0)
    # Stored as (in_features, out_features) so the kernel does x @ W.
    w1 = jax.random.uniform(k1, (784, 128), jnp.float32, -bound1, bound1)
    b1 = jax.random.uniform(k2, (128,), jnp.float32, -bound1, bound1)
    w2 = jax.random.uniform(k3, (128, 10), jnp.float32, -bound2, bound2)
    b2 = jax.random.uniform(k4, (10,), jnp.float32, -bound2, bound2)
    return w1, b1, w2, b2


if __name__ == "__main__":
    key = jax.random.PRNGKey(0)
    k_x, k_p = jax.random.split(key)

    # Small batch of MNIST-shaped inputs, NCHW.
    B = 2
    x = jax.random.normal(k_x, (B, 1, 28, 28), jnp.float32)
    w1, b1, w2, b2 = init_params(k_p)

    logits = classifier_forward(x, w1, b1, w2, b2)
    jax.block_until_ready(logits)

    # Pure-JAX f32 reference check (bf16 MXU operands -> loosened tolerance).
    x_flat = x.reshape(B, 784)
    ref = jnp.maximum(x_flat @ w1 + b1, 0.0) @ w2 + b2
    assert logits.shape == (B, 10)
    assert jnp.allclose(logits, ref, atol=3e-2, rtol=3e-2), (
        jnp.max(jnp.abs(logits - ref)))

    print("KERNEL_OK")
</pallas_src>

<mosaic_0001>
module attributes {stable_mosaic.version = 11 : i64} {
  func.func @_mlp_kernel(%arg0: i32, %arg1: memref<8x896xf32, #tpu.memory_space<vmem>>, %arg2: memref<896x128xbf16, #tpu.memory_space<vmem>>, %arg3: memref<1x128xf32, #tpu.memory_space<vmem>>, %arg4: memref<128x128xbf16, #tpu.memory_space<vmem>>, %arg5: memref<1x128xf32, #tpu.memory_space<vmem>>, %arg6: memref<8x128xf32, #tpu.memory_space<vmem>>) attributes {dimension_semantics = [#tpu.dimension_semantics<parallel>], iteration_bounds = array<i64: 1>, scalar_prefetch = 0 : i64, scratch_operands = 0 : i64, tpu.core_type = #tpu.core_type<tc>, window_params = [{transform_indices = @transform_0, window_bounds = array<i64: 8, 896>}, {pipeline_mode = #tpu.pipeline_mode<synchronous>, transform_indices = @transform_1, window_bounds = array<i64: 896, 128>}, {pipeline_mode = #tpu.pipeline_mode<synchronous>, transform_indices = @transform_2, window_bounds = array<i64: 1, 128>}, {pipeline_mode = #tpu.pipeline_mode<synchronous>, transform_indices = @transform_3, window_bounds = array<i64: 128, 128>}, {pipeline_mode = #tpu.pipeline_mode<synchronous>, transform_indices = @transform_4, window_bounds = array<i64: 1, 128>}, {transform_indices = @transform_5, window_bounds = array<i64: 8, 128>}]} {
    %c0 = arith.constant 0 : index
    %c0_0 = arith.constant 0 : index
    %0 = vector.load %arg1[%c0, %c0_0] : memref<8x896xf32, #tpu.memory_space<vmem>>, vector<8x896xf32>
    %1 = arith.truncf %0 : vector<8x896xf32> to vector<8x896xbf16>
    %c0_1 = arith.constant 0 : index
    %c0_2 = arith.constant 0 : index
    %2 = vector.load %arg2[%c0_1, %c0_2] : memref<896x128xbf16, #tpu.memory_space<vmem>>, vector<896x128xbf16>
    %cst = arith.constant dense<0.000000e+00> : vector<8x128xf32>
    %3 = tpu.matmul %1, %2, %cst {dimension_numbers = #tpu.dot_dimension_numbers<[1], [0], [0], [1], [0, 0, 1, 1], [], []>} : vector<8x896xbf16>, vector<896x128xbf16>, vector<8x128xf32> -> vector<8x128xf32>
    %c0_3 = arith.constant 0 : index
    %c0_4 = arith.constant 0 : index
    %4 = vector.load %arg3[%c0_3, %c0_4] : memref<1x128xf32, #tpu.memory_space<vmem>>, vector<1x128xf32>
    %5 = vector.broadcast %4 : vector<1x128xf32> to vector<8x128xf32>
    %6 = arith.addf %3, %5 : vector<8x128xf32>
    %cst_5 = arith.constant 0.000000e+00 : f32
    %7 = vector.broadcast %cst_5 : f32 to vector<8x128xf32>
    %8 = arith.maximumf %6, %7 : vector<8x128xf32>
    %9 = arith.truncf %8 : vector<8x128xf32> to vector<8x128xbf16>
    %c0_6 = arith.constant 0 : index
    %c0_7 = arith.constant 0 : index
    %10 = vector.load %arg4[%c0_6, %c0_7] : memref<128x128xbf16, #tpu.memory_space<vmem>>, vector<128x128xbf16>
    %cst_8 = arith.constant dense<0.000000e+00> : vector<8x128xf32>
    %11 = tpu.matmul %9, %10, %cst_8 {dimension_numbers = #tpu.dot_dimension_numbers<[1], [0], [0], [1], [0, 0, 1, 1], [], []>} : vector<8x128xbf16>, vector<128x128xbf16>, vector<8x128xf32> -> vector<8x128xf32>
    %c0_9 = arith.constant 0 : index
    %c0_10 = arith.constant 0 : index
    %12 = vector.load %arg5[%c0_9, %c0_10] : memref<1x128xf32, #tpu.memory_space<vmem>>, vector<1x128xf32>
    %13 = vector.broadcast %12 : vector<1x128xf32> to vector<8x128xf32>
    %14 = arith.addf %11, %13 : vector<8x128xf32>
    %c0_11 = arith.constant 0 : index
    %c0_12 = arith.constant 0 : index
    %15 = vector.load %arg6[%c0_11, %c0_12] : memref<8x128xf32, #tpu.memory_space<vmem>>, vector<8x128xf32>
    tpu.vector_store %arg6[%c0_11, %c0_12], %14 {strides = array<i32>} : memref<8x128xf32, #tpu.memory_space<vmem>>, vector<8x128xf32>,
    return
  }
  func.func @transform_0(%arg0: i32) -> (i32, i32) {
    %c0_i32 = arith.constant 0 : i32
    %c0_i32_0 = arith.constant 0 : i32
    return %arg0, %c0_i32 : i32, i32
  }
  func.func @transform_1(%arg0: i32) -> (i32, i32) {
    %c0_i32 = arith.constant 0 : i32
    %c0_i32_0 = arith.constant 0 : i32
    %c0_i32_1 = arith.constant 0 : i32
    return %c0_i32, %c0_i32_0 : i32, i32
  }
  func.func @transform_2(%arg0: i32) -> (i32, i32) {
    %c0_i32 = arith.constant 0 : i32
    %c0_i32_0 = arith.constant 0 : i32
    %c0_i32_1 = arith.constant 0 : i32
    return %c0_i32, %c0_i32_0 : i32, i32
  }
  func.func @transform_3(%arg0: i32) -> (i32, i32) {
    %c0_i32 = arith.constant 0 : i32
    %c0_i32_0 = arith.constant 0 : i32
    %c0_i32_1 = arith.constant 0 : i32
    return %c0_i32, %c0_i32_0 : i32, i32
  }
  func.func @transform_4(%arg0: i32) -> (i32, i32) {
    %c0_i32 = arith.constant 0 : i32
    %c0_i32_0 = arith.constant 0 : i32
    %c0_i32_1 = arith.constant 0 : i32
    return %c0_i32, %c0_i32_0 : i32, i32
  }
  func.func @transform_5(%arg0: i32) -> (i32, i32) {
    %c0_i32 = arith.constant 0 : i32
    %c0_i32_0 = arith.constant 0 : i32
    return %arg0, %c0_i32 : i32, i32
  }
}

</mosaic_0001>

<llo_original>
// kernel: tpu_custom_call.1
$region0: #{tpu_custom_call.1}
  #allocation0 [shape = 'u32[]', space=smem, size = 0x4, offset = 0x4, fixed_abs, tag = 'smem constant byte address 0x4 - core index']
  #allocation1 [shape = 'u32[144,128]{1,0:T(1,128)}', space=vmem, size = 0x12000, scoped, tag = 'internal scratch']
  %s0 = inlined_call_operand.hbm [shape: f32[8,896], index: 0, kind: input, shape index: {}]
  %s1 = inlined_call_operand.hbm [shape: bf16[896,128], index: 1, kind: input, shape index: {}]
  %s2 = inlined_call_operand.vmem [shape: f32[1,128], index: 2, kind: input, shape index: {}]
  %s3 = inlined_call_operand.hbm [shape: bf16[128,128], index: 3, kind: input, shape index: {}]
  %s4 = inlined_call_operand.vmem [shape: f32[1,128], index: 4, kind: input, shape index: {}]
  %s5 = inlined_call_operand.hbm [shape: f32[8,128], index: 5, kind: output, shape index: {}]
  %s6 = sld [smem:[#allocation0]]
  $region42: #{tpu_custom_call.1} parent=0
    _
  %s8 = ssub.s32 1, %s6
  %s9 = scalar_select 0, %s8, %s6
  $region1: #{tpu_custom_call.1} parent=0
    #allocation2 [shape = 'u8[28672]{0}', space=vmem, size = 0x7000, scoped, tag = 'input window, operand 0, single buffered']
    #allocation3 [shape = 's32[1]{0}', space=sflag, size = 0x4, scoped, tag = 'scoped memory for tpu_custom_call.1']
    #allocation4 [shape = 's32[1]{0}', space=sflag, size = 0x4, scoped, tag = 'scoped memory for tpu_custom_call.1']
    #allocation5 [shape = 'u8[229376]{0}', space=vmem, size = 0x38000, scoped, tag = 'input window, operand 1, single buffered']
    #allocation6 [shape = 's32[1]{0}', space=sflag, size = 0x4, scoped, tag = 'scoped memory for tpu_custom_call.1']
    #allocation7 [shape = 'u8[32768]{0}', space=vmem, size = 0x8000, scoped, tag = 'input window, operand 3, single buffered']
    #allocation8 [shape = 'u8[4096]{0}', space=vmem, size = 0x1000, scoped, tag = 'output window, operand 0, single buffered']
    %10 = vsyncpa [#allocation3], 0
    %11 = vsyncpa [#allocation6], 0
    %12 = vsyncpa [#allocation4], 0
    // Predicated region
    $region2: #{tpu_custom_call.1} parent=1 // pred_check
      _
    $region3: #{tpu_custom_call.1} parent=1 // pred_check_branch
      %14 = sbr.rel (0) target = $region5
    $region4: #{tpu_custom_call.1} parent=1 // pred_region
      %s16 = ssub.s32 896, 896
      %17 = vsyncadd [#allocation3], %s16
      %s19 = sshll.u32 [#allocation2], 4
      %s20 = int_to_ptr.vmem [resolvable:$true] %s19
      %22 = dma.hbm_to_vmem [thread:$0]  %s0, 896, %s20, [#allocation3]
    $region5: #{tpu_custom_call.1} parent=1 // pred_fallthru
      _
    // Predicated region
    $region6: #{tpu_custom_call.1} parent=1 // pred_check
      _
    $region7: #{tpu_custom_call.1} parent=1 // pred_check_branch
      %24 = sbr.rel (0) target = $region9
    $region8: #{tpu_custom_call.1} parent=1 // pred_region
      %s26 = ssub.s32 7168, 7168
      %27 = vsyncadd [#allocation6], %s26
      %s28 = sshll.u32 [#allocation5], 4
      %s29 = int_to_ptr.vmem [resolvable:$true] %s28
      %34 = dma.hbm_to_vmem [thread:$0]  %s1, 7168, %s29, [#allocation6], 64, 64, 4
    $region9: #{tpu_custom_call.1} parent=1 // pred_fallthru
      _
    // Predicated region
    $region10: #{tpu_custom_call.1} parent=1 // pred_check
      _
    $region11: #{tpu_custom_call.1} parent=1 // pred_check_branch
      %36 = sbr.rel (0) target = $region13
    $region12: #{tpu_custom_call.1} parent=1 // pred_region
      _
    $region13: #{tpu_custom_call.1} parent=1 // pred_fallthru
      _
    // Predicated region
    $region14: #{tpu_custom_call.1} parent=1 // pred_check
      _
    $region15: #{tpu_custom_call.1} parent=1 // pred_check_branch
      %38 = sbr.rel (0) target = $region17
    $region16: #{tpu_custom_call.1} parent=1 // pred_region
      %s40 = ssub.s32 1024, 1024
      %41 = vsyncadd [#allocation6], %s40
      %s42 = sshll.u32 [#allocation7], 4
      %s43 = int_to_ptr.vmem [resolvable:$true] %s42
      %48 = dma.hbm_to_vmem [thread:$0]  %s3, 1024, %s43, [#allocation6], 64, 64, 4
    $region17: #{tpu_custom_call.1} parent=1 // pred_fallthru
      _
    // Predicated region
    $region18: #{tpu_custom_call.1} parent=1 // pred_check
      _
    $region19: #{tpu_custom_call.1} parent=1 // pred_check_branch
      %50 = sbr.rel (0) target = $region21
    $region20: #{tpu_custom_call.1} parent=1 // pred_region
      _
    $region21: #{tpu_custom_call.1} parent=1 // pred_fallthru
      _
    // Predicated region
    $region22: #{tpu_custom_call.1} parent=1 // pred_check
      _
    $region23: #{tpu_custom_call.1} parent=1 // pred_check_branch
      %52 = sbr.rel (0) target = $region25
    $region24: #{tpu_custom_call.1} parent=1 // pred_region
      %53 = dma.done [#allocation3], 896
    $region25: #{tpu_custom_call.1} parent=1 // pred_fallthru
      _
    // Predicated region
    $region26: #{tpu_custom_call.1} parent=1 // pred_check
      _
    $region27: #{tpu_custom_call.1} parent=1 // pred_check_branch
      %55 = sbr.rel (0) target = $region29
    $region28: #{tpu_custom_call.1} parent=1 // pred_region
      %56 = dma.done [#allocation6], 7168
    $region29: #{tpu_custom_call.1} parent=1 // pred_fallthru
      _
    // Predicated region
    $region30: #{tpu_custom_call.1} parent=1 // pred_check
      _
    $region31: #{tpu_custom_call.1} parent=1 // pred_check_branch
      %58 = sbr.rel (0) target = $region33
    $region32: #{tpu_custom_call.1} parent=1 // pred_region
      %59 = dma.done [#allocation6], 1024
    $region33: #{tpu_custom_call.1} parent=1 // pred_fallthru
      _
    %v61 = vld [vmem:[#allocation2] sm:$0xff]
    %v62 = vld [vmem:[#allocation2 + $0x8] sm:$0xff]
    %v63 = vld [vmem:[#allocation2 + $0x10] sm:$0xff]
    %v64 = vld [vmem:[#allocation2 + $0x18] sm:$0xff]
    %v65 = vld [vmem:[#allocation2 + $0x20] sm:$0xff]
    %v66 = vld [vmem:[#allocation2 + $0x28] sm:$0xff]
    %v67 = vld [vmem:[#allocation2 + $0x30] sm:$0xff]
    %v68 = vpack.c.bf16 %v61, %v61
    %v69 = vpack.c.bf16 %v62, %v62
    %v70 = vpack.c.bf16 %v63, %v63
    %v71 = vpack.c.bf16 %v64, %v64
    %v72 = vpack.c.bf16 %v65, %v65
    %v73 = vpack.c.bf16 %v66, %v66
    %v74 = vpack.c.bf16 %v67, %v67
    %v75 = vld [vmem:[#allocation5] sm:$0xf]
    %v76 = vld [vmem:[#allocation5 + $0x4] sm:$0xf]
    %v77 = vld [vmem:[#allocation5 + $0x8] sm:$0xf]
    %v78 = vld [vmem:[#allocation5 + $0xc] sm:$0xf]
    %v79 = vld [vmem:[#allocation5 + $0x10] sm:$0xf]
    %v80 = vld [vmem:[#allocation5 + $0x14] sm:$0xf]
    %v81 = vld [vmem:[#allocation5 + $0x18] sm:$0xf]
    %v82 = vld [vmem:[#allocation5 + $0x1c] sm:$0xf]
    %v83 = vld [vmem:[#allocation5 + $0x20] sm:$0xf]
    %v84 = vld [vmem:[#allocation5 + $0x24] sm:$0xf]
    %v85 = vld [vmem:[#allocation5 + $0x28] sm:$0xf]
    %v86 = vld [vmem:[#allocation5 + $0x2c] sm:$0xf]
    %v87 = vld [vmem:[#allocation5 + $0x30] sm:$0xf]
    %v88 = vld [vmem:[#allocation5 + $0x34] sm:$0xf]
    %v89 = vld [vmem:[#allocation5 + $0x38] sm:$0xf]
    %v90 = vld [vmem:[#allocation5 + $0x3c] sm:$0xf]
    %v91 = vld [vmem:[#allocation5 + $0x40] sm:$0xf]
    %v92 = vld [vmem:[#allocation5 + $0x44] sm:$0xf]
    %v93 = vld [vmem:[#allocation5 + $0x48] sm:$0xf]
    %v94 = vld [vmem:[#allocation5 + $0x4c] sm:$0xf]
    %v95 = vld [vmem:[#allocation5 + $0x50] sm:$0xf]
    %v96 = vld [vmem:[#allocation5 + $0x54] sm:$0xf]
    %v97 = vld [vmem:[#allocation5 + $0x58] sm:$0xf]
    %v98 = vld [vmem:[#allocation5 + $0x5c] sm:$0xf]
    %v99 = vld [vmem:[#allocation5 + $0x60] sm:$0xf]
    %v100 = vld [vmem:[#allocation5 + $0x64] sm:$0xf]
    %v101 = vld [vmem:[#allocation5 + $0x68] sm:$0xf]
    %v102 = vld [vmem:[#allocation5 + $0x6c] sm:$0xf]
    %v103 = vld [vmem:[#allocation5 + $0x70] sm:$0xf]
    %v104 = vld [vmem:[#allocation5 + $0x74] sm:$0xf]
    %v105 = vld [vmem:[#allocation5 + $0x78] sm:$0xf]
    %v106 = vld [vmem:[#allocation5 + $0x7c] sm:$0xf]
    %v107 = vld [vmem:[#allocation5 + $0x80] sm:$0xf]
    %v108 = vld [vmem:[#allocation5 + $0x84] sm:$0xf]
    %v109 = vld [vmem:[#allocation5 + $0x88] sm:$0xf]
    %v110 = vld [vmem:[#allocation5 + $0x8c] sm:$0xf]
    %v111 = vld [vmem:[#allocation5 + $0x90] sm:$0xf]
    %v112 = vld [vmem:[#allocation5 + $0x94] sm:$0xf]
    %v113 = vld [vmem:[#allocation5 + $0x98] sm:$0xf]
    %v114 = vld [vmem:[#allocation5 + $0x9c] sm:$0xf]
    %v115 = vld [vmem:[#allocation5 + $0xa0] sm:$0xf]
    %v116 = vld [vmem:[#allocation5 + $0xa4] sm:$0xf]
    %v117 = vld [vmem:[#allocation5 + $0xa8] sm:$0xf]
    %v118 = vld [vmem:[#allocation5 + $0xac] sm:$0xf]
    %v119 = vld [vmem:[#allocation5 + $0xb0] sm:$0xf]
    %v120 = vld [vmem:[#allocation5 + $0xb4] sm:$0xf]
    %v121 = vld [vmem:[#allocation5 + $0xb8] sm:$0xf]
    %v122 = vld [vmem:[#allocation5 + $0xbc] sm:$0xf]
    %v123 = vld [vmem:[#allocation5 + $0xc0] sm:$0xf]
    %v124 = vld [vmem:[#allocation5 + $0xc4] sm:$0xf]
    %v125 = vld [vmem:[#allocation5 + $0xc8] sm:$0xf]
    %v126 = vld [vmem:[#allocation5 + $0xcc] sm:$0xf]
    %v127 = vld [vmem:[#allocation5 + $0xd0] sm:$0xf]
    %v128 = vld [vmem:[#allocation5 + $0xd4] sm:$0xf]
    %v129 = vld [vmem:[#allocation5 + $0xd8] sm:$0xf]
    %v130 = vld [vmem:[#allocation5 + $0xdc] sm:$0xf]
    %v131 = vld [vmem:[#allocation5 + $0xe0] sm:$0xf]
    %v132 = vld [vmem:[#allocation5 + $0xe4] sm:$0xf]
    %v133 = vld [vmem:[#allocation5 + $0xe8] sm:$0xf]
    %v134 = vld [vmem:[#allocation5 + $0xec] sm:$0xf]
    %v135 = vld [vmem:[#allocation5 + $0xf0] sm:$0xf]
    %v136 = vld [vmem:[#allocation5 + $0xf4] sm:$0xf]
    %v137 = vld [vmem:[#allocation5 + $0xf8] sm:$0xf]
    %v138 = vld [vmem:[#allocation5 + $0xfc] sm:$0xf]
    %v139 = vld [vmem:[#allocation5 + $0x100] sm:$0xf]
    %v140 = vld [vmem:[#allocation5 + $0x104] sm:$0xf]
    %v141 = vld [vmem:[#allocation5 + $0x108] sm:$0xf]
    %v142 = vld [vmem:[#allocation5 + $0x10c] sm:$0xf]
    %v143 = vld [vmem:[#allocation5 + $0x110] sm:$0xf]
    %v144 = vld [vmem:[#allocation5 + $0x114] sm:$0xf]
    %v145 = vld [vmem:[#allocation5 + $0x118] sm:$0xf]
    %v146 = vld [vmem:[#allocation5 + $0x11c] sm:$0xf]
    %v147 = vld [vmem:[#allocation5 + $0x120] sm:$0xf]
    %v148 = vld [vmem:[#allocation5 + $0x124] sm:$0xf]
    %v149 = vld [vmem:[#allocation5 + $0x128] sm:$0xf]
    %v150 = vld [vmem:[#allocation5 + $0x12c] sm:$0xf]
    %v151 = vld [vmem:[#allocation5 + $0x130] sm:$0xf]
    %v152 = vld [vmem:[#allocation5 + $0x134] sm:$0xf]
    %v153 = vld [vmem:[#allocation5 + $0x138] sm:$0xf]
    %v154 = vld [vmem:[#allocation5 + $0x13c] sm:$0xf]
    %v155 = vld [vmem:[#allocation5 + $0x140] sm:$0xf]
    %v156 = vld [vmem:[#allocation5 + $0x144] sm:$0xf]
    %v157 = vld [vmem:[#allocation5 + $0x148] sm:$0xf]
    %v158 = vld [vmem:[#allocation5 + $0x14c] sm:$0xf]
    %v159 = vld [vmem:[#allocation5 + $0x150] sm:$0xf]
    %v160 = vld [vmem:[#allocation5 + $0x154] sm:$0xf]
    %v161 = vld [vmem:[#allocation5 + $0x158] sm:$0xf]
    %v162 = vld [vmem:[#allocation5 + $0x15c] sm:$0xf]
    %v163 = vld [vmem:[#allocation5 + $0x160] sm:$0xf]
    %v164 = vld [vmem:[#allocation5 + $0x164] sm:$0xf]
    %v165 = vld [vmem:[#allocation5 + $0x168] sm:$0xf]
    %v166 = vld [vmem:[#allocation5 + $0x16c] sm:$0xf]
    %v167 = vld [vmem:[#allocation5 + $0x170] sm:$0xf]
    %v168 = vld [vmem:[#allocation5 + $0x174] sm:$0xf]
    %v169 = vld [vmem:[#allocation5 + $0x178] sm:$0xf]
    %v170 = vld [vmem:[#allocation5 + $0x17c] sm:$0xf]
    %v171 = vld [vmem:[#allocation5 + $0x180] sm:$0xf]
    %v172 = vld [vmem:[#allocation5 + $0x184] sm:$0xf]
    %v173 = vld [vmem:[#allocation5 + $0x188] sm:$0xf]
    %v174 = vld [vmem:[#allocation5 + $0x18c] sm:$0xf]
    %v175 = vld [vmem:[#allocation5 + $0x190] sm:$0xf]
    %v176 = vld [vmem:[#allocation5 + $0x194] sm:$0xf]
    %v177 = vld [vmem:[#allocation5 + $0x198] sm:$0xf]
    %v178 = vld [vmem:[#allocation5 + $0x19c] sm:$0xf]
    %v179 = vld [vmem:[#allocation5 + $0x1a0] sm:$0xf]
    %v180 = vld [vmem:[#allocation5 + $0x1a4] sm:$0xf]
    %v181 = vld [vmem:[#allocation5 + $0x1a8] sm:$0xf]
    %v182 = vld [vmem:[#allocation5 + $0x1ac] sm:$0xf]
    %v183 = vld [vmem:[#allocation5 + $0x1b0] sm:$0xf]
    %v184 = vld [vmem:[#allocation5 + $0x1b4] sm:$0xf]
    %v185 = vld [vmem:[#allocation5 + $0x1b8] sm:$0xf]
    %v186 = vld [vmem:[#allocation5 + $0x1bc] sm:$0xf]
    %v187 = vld [vmem:[%s2] sm:$0x1]
    %v189 = vlaneseq
    %v190 = vshrl.u32 %v189, 7
    %v191 = vsub.s32 0, %v190
    %v192 = vrot.slane %v187, %v191
    %v306 = vunpack.c.l.b16 %v75
    %v307 = vunpack.c.l.b16 %v76
    %v308 = vunpack.c.l.b16 %v77
    %v309 = vunpack.c.l.b16 %v78
    %v310 = vunpack.c.l.b16 %v79
    %v311 = vunpack.c.l.b16 %v80
    %v312 = vunpack.c.l.b16 %v81
    %v313 = vunpack.c.l.b16 %v82
    %v314 = vunpack.c.l.b16 %v83
    %v315 = vunpack.c.l.b16 %v84
    %v316 = vunpack.c.l.b16 %v85
    %v317 = vunpack.c.l.b16 %v86
    %v318 = vunpack.c.l.b16 %v87
    %v319 = vunpack.c.l.b16 %v88
    %v320 = vunpack.c.l.b16 %v89
    %v321 = vunpack.c.l.b16 %v90
    %v322 = vunpack.c.l.b16 %v91
    %v323 = vunpack.c.l.b16 %v92
    %v324 = vunpack.c.l.b16 %v93
    %v325 = vunpack.c.l.b16 %v94
    %v326 = vunpack.c.l.b16 %v95
    %v327 = vunpack.c.l.b16 %v96
    %v328 = vunpack.c.l.b16 %v97
    %v329 = vunpack.c.l.b16 %v98
    %v330 = vunpack.c.l.b16 %v99
    %v331 = vunpack.c.l.b16 %v100
    %v332 = vunpack.c.l.b16 %v101
    %v333 = vunpack.c.l.b16 %v102
    %v334 = vunpack.c.l.b16 %v103
    %v335 = vunpack.c.l.b16 %v104
    %v336 = vunpack.c.l.b16 %v105
    %v337 = vunpack.c.l.b16 %v106
    %v338 = vunpack.c.l.b16 %v107
    %v339 = vunpack.c.l.b16 %v108
    %v340 = vunpack.c.l.b16 %v109
    %v341 = vunpack.c.l.b16 %v110
    %v342 = vunpack.c.l.b16 %v111
    %v343 = vunpack.c.l.b16 %v112
    %v344 = vunpack.c.l.b16 %v113
    %v345 = vunpack.c.l.b16 %v114
    %v346 = vunpack.c.l.b16 %v115
    %v347 = vunpack.c.l.b16 %v116
    %v348 = vunpack.c.l.b16 %v117
    %v349 = vunpack.c.l.b16 %v118
    %v350 = vunpack.c.l.b16 %v119
    %v351 = vunpack.c.l.b16 %v120
    %v352 = vunpack.c.l.b16 %v121
    %v353 = vunpack.c.l.b16 %v122
    %v354 = vunpack.c.l.b16 %v123
    %v355 = vunpack.c.l.b16 %v124
    %v356 = vunpack.c.l.b16 %v125
    %v357 = vunpack.c.l.b16 %v126
    %v358 = vunpack.c.l.b16 %v127
    %v359 = vunpack.c.l.b16 %v128
    %v360 = vunpack.c.l.b16 %v129
    %v361 = vunpack.c.l.b16 %v130
    %v362 = vunpack.c.l.b16 %v131
    %v363 = vunpack.c.l.b16 %v132
    %v364 = vunpack.c.l.b16 %v133
    %v365 = vunpack.c.l.b16 %v134
    %v366 = vunpack.c.l.b16 %v135
    %v367 = vunpack.c.l.b16 %v136
    %v368 = vunpack.c.l.b16 %v137
    %v369 = vunpack.c.l.b16 %v138
    %v370 = vunpack.c.l.b16 %v139
    %v371 = vunpack.c.l.b16 %v140
    %v372 = vunpack.c.l.b16 %v141
    %v373 = vunpack.c.l.b16 %v142
    %v374 = vunpack.c.l.b16 %v143
    %v375 = vunpack.c.l.b16 %v144
    %v376 = vunpack.c.l.b16 %v145
    %v377 = vunpack.c.l.b16 %v146
    %v378 = vunpack.c.l.b16 %v147
    %v379 = vunpack.c.l.b16 %v148
    %v380 = vunpack.c.l.b16 %v149
    %v381 = vunpack.c.l.b16 %v150
    %v382 = vunpack.c.l.b16 %v151
    %v383 = vunpack.c.l.b16 %v152
    %v384 = vunpack.c.l.b16 %v153
    %v385 = vunpack.c.l.b16 %v154
    %v386 = vunpack.c.l.b16 %v155
    %v387 = vunpack.c.l.b16 %v156
    %v388 = vunpack.c.l.b16 %v157
    %v389 = vunpack.c.l.b16 %v158
    %v390 = vunpack.c.l.b16 %v159
    %v391 = vunpack.c.l.b16 %v160
    %v392 = vunpack.c.l.b16 %v161
    %v393 = vunpack.c.l.b16 %v162
    %v394 = vunpack.c.l.b16 %v163
    %v395 = vunpack.c.l.b16 %v164
    %v396 = vunpack.c.l.b16 %v165
    %v397 = vunpack.c.l.b16 %v166
    %v398 = vunpack.c.l.b16 %v167
    %v399 = vunpack.c.l.b16 %v168
    %v400 = vunpack.c.l.b16 %v169
    %v401 = vunpack.c.l.b16 %v170
    %v402 = vunpack.c.l.b16 %v171
    %v403 = vunpack.c.l.b16 %v172
    %v404 = vunpack.c.l.b16 %v173
    %v405 = vunpack.c.l.b16 %v174
    %v406 = vunpack.c.l.b16 %v175
    %v407 = vunpack.c.l.b16 %v176
    %v408 = vunpack.c.l.b16 %v177
    %v409 = vunpack.c.l.b16 %v178
    %v410 = vunpack.c.l.b16 %v179
    %v411 = vunpack.c.l.b16 %v180
    %v412 = vunpack.c.l.b16 %v181
    %v413 = vunpack.c.l.b16 %v182
    %v414 = vunpack.c.l.b16 %v183
    %v415 = vunpack.c.l.b16 %v184
    %v416 = vunpack.c.l.b16 %v185
    %v417 = vunpack.c.l.b16 %v186
    %v418 = vpack.c.b16 %v307, %v306
    %v419 = vpack.c.b16 %v309, %v308
    %v420 = vpack.c.b16 %v311, %v310
    %v421 = vpack.c.b16 %v313, %v312
    %v422 = vpack.c.b16 %v315, %v314
    %v423 = vpack.c.b16 %v317, %v316
    %v424 = vpack.c.b16 %v319, %v318
    %v425 = vpack.c.b16 %v321, %v320
    %v426 = vpack.c.b16 %v323, %v322
    %v427 = vpack.c.b16 %v325, %v324
    %v428 = vpack.c.b16 %v327, %v326
    %v429 = vpack.c.b16 %v329, %v328
    %v430 = vpack.c.b16 %v331, %v330
    %v431 = vpack.c.b16 %v333, %v332
    %v432 = vpack.c.b16 %v335, %v334
    %v433 = vpack.c.b16 %v337, %v336
    %v434 = vpack.c.b16 %v339, %v338
    %v435 = vpack.c.b16 %v341, %v340
    %v436 = vpack.c.b16 %v343, %v342
    %v437 = vpack.c.b16 %v345, %v344
    %v438 = vpack.c.b16 %v347, %v346
    %v439 = vpack.c.b16 %v349, %v348
    %v440 = vpack.c.b16 %v351, %v350
    %v441 = vpack.c.b16 %v353, %v352
    %v442 = vpack.c.b16 %v355, %v354
    %v443 = vpack.c.b16 %v357, %v356
    %v444 = vpack.c.b16 %v359, %v358
    %v445 = vpack.c.b16 %v361, %v360
    %v446 = vpack.c.b16 %v363, %v362
    %v447 = vpack.c.b16 %v365, %v364
    %v448 = vpack.c.b16 %v367, %v366
    %v449 = vpack.c.b16 %v369, %v368
    %v450 = vpack.c.b16 %v371, %v370
    %v451 = vpack.c.b16 %v373, %v372
    %v452 = vpack.c.b16 %v375, %v374
    %v453 = vpack.c.b16 %v377, %v376
    %v454 = vpack.c.b16 %v379, %v378
    %v455 = vpack.c.b16 %v381, %v380
    %v456 = vpack.c.b16 %v383, %v382
    %v457 = vpack.c.b16 %v385, %v384
    %v458 = vpack.c.b16 %v387, %v386
    %v459 = vpack.c.b16 %v389, %v388
    %v460 = vpack.c.b16 %v391, %v390
    %v461 = vpack.c.b16 %v393, %v392
    %v462 = vpack.c.b16 %v395, %v394
    %v463 = vpack.c.b16 %v397, %v396
    %v464 = vpack.c.b16 %v399, %v398
    %v465 = vpack.c.b16 %v401, %v400
    %v466 = vpack.c.b16 %v403, %v402
    %v467 = vpack.c.b16 %v405, %v404
    %v468 = vpack.c.b16 %v407, %v406
    %v469 = vpack.c.b16 %v409, %v408
    %v470 = vpack.c.b16 %v411, %v410
    %v471 = vpack.c.b16 %v413, %v412
    %v472 = vpack.c.b16 %v415, %v414
    %v473 = vpack.c.b16 %v417, %v416
    %530 = vmatprep.subr.bf16.mxu0 0
    %531 = vmatpush1.bf16.msra.mxu0 %v425
    %532 = vmatprep.subr.bf16.mxu0 0
    %533 = vmatpush1.bf16.msra.mxu0 %v424
    %534 = vmatprep.subr.bf16.mxu0 0
    %535 = vmatpush1.bf16.msra.mxu0 %v423
    %536 = vmatprep.subr.bf16.mxu0 0
    %537 = vmatpush1.bf16.msra.mxu0 %v422
    %538 = vmatprep.subr.bf16.mxu0 0
    %539 = vmatpush1.bf16.msra.mxu0 %v421
    %540 = vmatprep.subr.bf16.mxu0 0
    %541 = vmatpush1.bf16.msra.mxu0 %v420
    %542 = vmatprep.subr.bf16.mxu0 0
    %543 = vmatpush1.bf16.msra.mxu0 %v419
    %544 = vmatprep.subr.bf16.mxu0 0
    %545 = vmatpush1.bf16.msra.mxu0 %v418
    %546 = vmatprep.subr.bf16.mxu0 0
    %547 = vmatpush2.bf16.msra.mxu0 %v433
    %548 = vmatprep.subr.bf16.mxu0 0
    %549 = vmatpush2.bf16.msra.mxu0 %v432
    %550 = vmatprep.subr.bf16.mxu0 0
    %551 = vmatpush2.bf16.msra.mxu0 %v431
    %552 = vmatprep.subr.bf16.mxu0 0
    %553 = vmatpush2.bf16.msra.mxu0 %v430
    %554 = vmatprep.subr.bf16.mxu0 0
    %555 = vmatpush2.bf16.msra.mxu0 %v429
    %556 = vmatprep.subr.bf16.mxu0 0
    %557 = vmatpush2.bf16.msra.mxu0 %v428
    %558 = vmatprep.subr.bf16.mxu0 0
    %559 = vmatpush2.bf16.msra.mxu0 %v427
    %560 = vmatprep.subr.bf16.mxu0 0
    %561 = vmatpush2.bf16.msra.mxu0 %v426
    %562 = vmatprep.mubr.bf16.mxu0 %v69
    %563 = vmatmul.mubr.bf16.gmra.mxu0 %v68
    %v564 = vpop.f32.mrf.mxu0
    %v565 = vadd.f32 %v192, %v564
    %v566 = vpop.f32.mrf.mxu0
    %v567 = vpop.f32.mrf.mxu0
    %v568 = vpop.f32.mrf.mxu0
    %569 = vdwg.mxu0
    %570 = vmatprep.subr.bf16.mxu0 0
    %571 = vmatpush1.bf16.msra.mxu0 %v441
    %572 = vmatprep.subr.bf16.mxu0 0
    %573 = vmatpush1.bf16.msra.mxu0 %v440
    %574 = vmatprep.subr.bf16.mxu0 0
    %575 = vmatpush1.bf16.msra.mxu0 %v439
    %576 = vmatprep.subr.bf16.mxu0 0
    %577 = vmatpush1.bf16.msra.mxu0 %v438
    %578 = vmatprep.subr.bf16.mxu0 0
    %579 = vmatpush1.bf16.msra.mxu0 %v437
    %580 = vmatprep.subr.bf16.mxu0 0
    %581 = vmatpush1.bf16.msra.mxu0 %v436
    %582 = vmatprep.subr.bf16.mxu0 0
    %583 = vmatpush1.bf16.msra.mxu0 %v435
    %584 = vmatprep.subr.bf16.mxu0 0
    %585 = vmatpush1.bf16.msra.mxu0 %v434
    %586 = vmatprep.subr.bf16.mxu0 0
    %587 = vmatpush2.bf16.msra.mxu0 %v449
    %588 = vmatprep.subr.bf16.mxu0 0
    %589 = vmatpush2.bf16.msra.mxu0 %v448
    %590 = vmatprep.subr.bf16.mxu0 0
    %591 = vmatpush2.bf16.msra.mxu0 %v447
    %592 = vmatprep.subr.bf16.mxu0 0
    %593 = vmatpush2.bf16.msra.mxu0 %v446
    %594 = vmatprep.subr.bf16.mxu0 0
    %595 = vmatpush2.bf16.msra.mxu0 %v445
    %596 = vmatprep.subr.bf16.mxu0 0
    %597 = vmatpush2.bf16.msra.mxu0 %v444
    %598 = vmatprep.subr.bf16.mxu0 0
    %599 = vmatpush2.bf16.msra.mxu0 %v443
    %600 = vmatprep.subr.bf16.mxu0 0
    %601 = vmatpush2.bf16.msra.mxu0 %v442
    %602 = vmatprep.mubr.bf16.mxu0 %v71
    %603 = vmatmul.mubr.bf16.gmra.mxu0 %v70
    %v604 = vpop.f32.mrf.mxu0
    %v605 = vadd.f32 %v565, %v604
    %v606 = vpop.f32.mrf.mxu0
    %v607 = vpop.f32.mrf.mxu0
    %v608 = vpop.f32.mrf.mxu0
    %609 = vdwg.mxu0
    %610 = vmatprep.subr.bf16.mxu0 0
    %611 = vmatpush1.bf16.msra.mxu0 %v457
    %612 = vmatprep.subr.bf16.mxu0 0
    %613 = vmatpush1.bf16.msra.mxu0 %v456
    %614 = vmatprep.subr.bf16.mxu0 0
    %615 = vmatpush1.bf16.msra.mxu0 %v455
    %616 = vmatprep.subr.bf16.mxu0 0
    %617 = vmatpush1.bf16.msra.mxu0 %v454
    %618 = vmatprep.subr.bf16.mxu0 0
    %619 = vmatpush1.bf16.msra.mxu0 %v453
    %620 = vmatprep.subr.bf16.mxu0 0
    %621 = vmatpush1.bf16.msra.mxu0 %v452
    %622 = vmatprep.subr.bf16.mxu0 0
    %623 = vmatpush1.bf16.msra.mxu0 %v451
    %624 = vmatprep.subr.bf16.mxu0 0
    %625 = vmatpush1.bf16.msra.mxu0 %v450
    %626 = vmatprep.subr.bf16.mxu0 0
    %627 = vmatpush2.bf16.msra.mxu0 %v465
    %628 = vmatprep.subr.bf16.mxu0 0
    %629 = vmatpush2.bf16.msra.mxu0 %v464
    %630 = vmatprep.subr.bf16.mxu0 0
    %631 = vmatpush2.bf16.msra.mxu0 %v463
    %632 = vmatprep.subr.bf16.mxu0 0
    %633 = vmatpush2.bf16.msra.mxu0 %v462
    %634 = vmatprep.subr.bf16.mxu0 0
    %635 = vmatpush2.bf16.msra.mxu0 %v461
    %636 = vmatprep.subr.bf16.mxu0 0
    %637 = vmatpush2.bf16.msra.mxu0 %v460
    %638 = vmatprep.subr.bf16.mxu0 0
    %639 = vmatpush2.bf16.msra.mxu0 %v459
    %640 = vmatprep.subr.bf16.mxu0 0
    %641 = vmatpush2.bf16.msra.mxu0 %v458
    %642 = vmatprep.mubr.bf16.mxu0 %v73
    %643 = vmatmul.mubr.bf16.gmra.mxu0 %v72
    %v644 = vpop.f32.mrf.mxu0
    %v645 = vadd.f32 %v605, %v644
    %v646 = vpop.f32.mrf.mxu0
    %v647 = vpop.f32.mrf.mxu0
    %v648 = vpop.f32.mrf.mxu0
    %649 = vdwg.mxu0
    %650 = vmatprep.subr.bf16.mxu0 0
    %651 = vmatpush1.bf16.msra.mxu0 %v473
    %652 = vmatprep.subr.bf16.mxu0 0
    %653 = vmatpush1.bf16.msra.mxu0 %v472
    %654 = vmatprep.subr.bf16.mxu0 0
    %655 = vmatpush1.bf16.msra.mxu0 %v471
    %656 = vmatprep.subr.bf16.mxu0 0
    %657 = vmatpush1.bf16.msra.mxu0 %v470
    %658 = vmatprep.subr.bf16.mxu0 0
    %659 = vmatpush1.bf16.msra.mxu0 %v469
    %660 = vmatprep.subr.bf16.mxu0 0
    %661 = vmatpush1.bf16.msra.mxu0 %v468
    %662 = vmatprep.subr.bf16.mxu0 0
    %663 = vmatpush1.bf16.msra.mxu0 %v467
    %664 = vmatprep.subr.bf16.mxu0 0
    %665 = vmatpush1.bf16.msra.mxu0 %v466
    %666 = vmatprep.subr.bf16.mxu0 0
    %667 = vmatpush2.bf16.msra.mxu0 0
    %668 = vmatprep.subr.bf16.mxu0 0
    %669 = vmatpush2.bf16.msra.mxu0 0
    %670 = vmatprep.subr.bf16.mxu0 0
    %671 = vmatpush2.bf16.msra.mxu0 0
    %672 = vmatprep.subr.bf16.mxu0 0
    %673 = vmatpush2.bf16.msra.mxu0 0
    %674 = vmatprep.subr.bf16.mxu0 0
    %675 = vmatpush2.bf16.msra.mxu0 0
    %676 = vmatprep.subr.bf16.mxu0 0
    %677 = vmatpush2.bf16.msra.mxu0 0
    %678 = vmatprep.subr.bf16.mxu0 0
    %679 = vmatpush2.bf16.msra.mxu0 0
    %680 = vmatprep.subr.bf16.mxu0 0
    %681 = vmatpush2.bf16.msra.mxu0 0
    %682 = vmatprep.mubr.bf16.mxu0 0
    %683 = vmatmul.mubr.bf16.gmra.mxu0 %v74
    %v684 = vpop.f32.mrf.mxu0
    %v685 = vadd.f32 %v645, %v684
    %v686 = vpop.f32.mrf.mxu0
    %v687 = vpop.f32.mrf.mxu0
    %v688 = vpop.f32.mrf.mxu0
    %689 = vdwg.mxu0
    %v690 = vmax.f32 %v685, 0.0
    %v691 = vpack.c.bf16 %v690, %v690
    %v692 = vld [vmem:[#allocation7] sm:$0xf]
    %v693 = vld [vmem:[#allocation7 + $0x4] sm:$0xf]
    %v694 = vld [vmem:[#allocation7 + $0x8] sm:$0xf]
    %v695 = vld [vmem:[#allocation7 + $0xc] sm:$0xf]
    %v696 = vld [vmem:[#allocation7 + $0x10] sm:$0xf]
    %v697 = vld [vmem:[#allocation7 + $0x14] sm:$0xf]
    %v698 = vld [vmem:[#allocation7 + $0x18] sm:$0xf]
    %v699 = vld [vmem:[#allocation7 + $0x1c] sm:$0xf]
    %v700 = vld [vmem:[#allocation7 + $0x20] sm:$0xf]
    %v701 = vld [vmem:[#allocation7 + $0x24] sm:$0xf]
    %v702 = vld [vmem:[#allocation7 + $0x28] sm:$0xf]
    %v703 = vld [vmem:[#allocation7 + $0x2c] sm:$0xf]
    %v704 = vld [vmem:[#allocation7 + $0x30] sm:$0xf]
    %v705 = vld [vmem:[#allocation7 + $0x34] sm:$0xf]
    %v706 = vld [vmem:[#allocation7 + $0x38] sm:$0xf]
    %v707 = vld [vmem:[#allocation7 + $0x3c] sm:$0xf]
    %v708 = vld [vmem:[%s4] sm:$0x1]
    %v710 = vlaneseq
    %v711 = vshrl.u32 %v710, 7
    %v712 = vsub.s32 0, %v711
    %v713 = vrot.slane %v708, %v712
    %v731 = vunpack.c.l.b16 %v692
    %v732 = vunpack.c.l.b16 %v693
    %v733 = vunpack.c.l.b16 %v694
    %v734 = vunpack.c.l.b16 %v695
    %v735 = vunpack.c.l.b16 %v696
    %v736 = vunpack.c.l.b16 %v697
    %v737 = vunpack.c.l.b16 %v698
    %v738 = vunpack.c.l.b16 %v699
    %v739 = vunpack.c.l.b16 %v700
    %v740 = vunpack.c.l.b16 %v701
    %v741 = vunpack.c.l.b16 %v702
    %v742 = vunpack.c.l.b16 %v703
    %v743 = vunpack.c.l.b16 %v704
    %v744 = vunpack.c.l.b16 %v705
    %v745 = vunpack.c.l.b16 %v706
    %v746 = vunpack.c.l.b16 %v707
    %v747 = vpack.c.b16 %v732, %v731
    %v748 = vpack.c.b16 %v734, %v733
    %v749 = vpack.c.b16 %v736, %v735
    %v750 = vpack.c.b16 %v738, %v737
    %v751 = vpack.c.b16 %v740, %v739
    %v752 = vpack.c.b16 %v742, %v741
    %v753 = vpack.c.b16 %v744, %v743
    %v754 = vpack.c.b16 %v746, %v745
    %763 = vmatprep.subr.bf16.mxu0 0
    %764 = vmatpush1.bf16.msra.mxu0 %v754
    %765 = vmatprep.subr.bf16.mxu0 0
    %766 = vmatpush1.bf16.msra.mxu0 %v753
    %767 = vmatprep.subr.bf16.mxu0 0
    %768 = vmatpush1.bf16.msra.mxu0 %v752
    %769 = vmatprep.subr.bf16.mxu0 0
    %770 = vmatpush1.bf16.msra.mxu0 %v751
    %771 = vmatprep.subr.bf16.mxu0 0
    %772 = vmatpush1.bf16.msra.mxu0 %v750
    %773 = vmatprep.subr.bf16.mxu0 0
    %774 = vmatpush1.bf16.msra.mxu0 %v749
    %775 = vmatprep.subr.bf16.mxu0 0
    %776 = vmatpush1.bf16.msra.mxu0 %v748
    %777 = vmatprep.subr.bf16.mxu0 0
    %778 = vmatpush1.bf16.msra.mxu0 %v747
    %779 = vmatprep.subr.bf16.mxu0 0
    %780 = vmatpush2.bf16.msra.mxu0 0
    %781 = vmatprep.subr.bf16.mxu0 0
    %782 = vmatpush2.bf16.msra.mxu0 0
    %783 = vmatprep.subr.bf16.mxu0 0
    %784 = vmatpush2.bf16.msra.mxu0 0
    %785 = vmatprep.subr.bf16.mxu0 0
    %786 = vmatpush2.bf16.msra.mxu0 0
    %787 = vmatprep.subr.bf16.mxu0 0
    %788 = vmatpush2.bf16.msra.mxu0 0
    %789 = vmatprep.subr.bf16.mxu0 0
    %790 = vmatpush2.bf16.msra.mxu0 0
    %791 = vmatprep.subr.bf16.mxu0 0
    %792 = vmatpush2.bf16.msra.mxu0 0
    %793 = vmatprep.subr.bf16.mxu0 0
    %794 = vmatpush2.bf16.msra.mxu0 0
    %795 = vmatprep.mubr.bf16.mxu0 0
    %796 = vmatmul.mubr.bf16.gmra.mxu0 %v691
    %v797 = vpop.f32.mrf.mxu0
    %v798 = vadd.f32 %v713, %v797
    %v799 = vpop.f32.mrf.mxu0
    %v800 = vpop.f32.mrf.mxu0
    %v801 = vpop.f32.mrf.mxu0
    %802 = vdwg.mxu0
    %803 = vst [vmem:[#allocation8] sm:$0xff] %v798
    // Predicated region
    $region34: #{tpu_custom_call.1} parent=1 // pred_check
      _
    $region35: #{tpu_custom_call.1} parent=1 // pred_check_branch
      %805 = sbr.rel (0) target = $region37
    $region36: #{tpu_custom_call.1} parent=1 // pred_region
      %s807 = ssub.s32 128, 128
      %808 = vsyncadd [#allocation4], %s807
      %s810 = sshll.u32 [#allocation8], 4
      %s811 = int_to_ptr.vmem [resolvable:$true] %s810
      %813 = dma.vmem_to_hbm [thread:$0]  %s811, 128, %s5, [#allocation4]
    $region37: #{tpu_custom_call.1} parent=1 // pred_fallthru
      _
    // Predicated region
    $region38: #{tpu_custom_call.1} parent=1 // pred_check
      _
    $region39: #{tpu_custom_call.1} parent=1 // pred_check_branch
      %815 = sbr.rel (0) target = $region41
    $region40: #{tpu_custom_call.1} parent=1 // pred_region
      %816 = dma.done [#allocation4], 128
    $region41: #{tpu_custom_call.1} parent=1 // pred_fallthru
      _
    %817 = vsyncpa [#allocation3], 1
    %818 = vsyncpa [#allocation6], 1
    %819 = vsyncpa [#allocation4], 1

</llo_original>
